<compile_context>
chip_gen: v5e
topology: v5e:2x2
jax: 0.10.0
libtpu: 0.0.40
codegen_flags: <defaults>
</compile_context>

<pallas_src>
import functools
import numpy as np
import jax
import jax.numpy as jnp
from jax import lax
from jax.experimental import pallas as pl
from jax.experimental.pallas import tpu as pltpu


def _round_up(x, m):
    return ((x + m - 1) // m) * m


def _vmem_cap_bytes():
    """Generation-aware VMEM cap: ~3/4 of physical VMEM (v5e/v6e 128 MiB ->
    ~96 MiB, v7x 64 MiB -> 48 MiB).  Falls back to the smallest assumption."""
    try:
        phys = int(pltpu.get_tpu_info().vmem_capacity_bytes)
    except Exception:
        phys = 64 * 1024 * 1024
    return max(32 * 1024 * 1024, phys * 3 // 4)


# ---------------------------------------------------------------------------
# Kernel A: fused QKV projection (single MXU matmul), row-tiled + parallel.
# ---------------------------------------------------------------------------
def _qkv_proj_kernel(x_ref, w_ref, b_ref, q_ref, k_ref, v_ref, *, a_dim):
    # TODO(synk): bf16 x/w inputs would roughly double MXU throughput on all
    # generations; kept fp32 to stay within tight tolerance of the reference.
    qkv = jnp.dot(x_ref[...], w_ref[...],
                  preferred_element_type=jnp.float32) + b_ref[...]
    q_ref[...] = qkv[:, :a_dim]
    k_ref[...] = qkv[:, a_dim:2 * a_dim]
    v_ref[...] = qkv[:, 2 * a_dim:]


# ---------------------------------------------------------------------------
# Kernel B: per-edge q.k products.  Edge-tiled ("parallel") grid; q/k stay
# VMEM-resident (constant index_map -> fetched once).  Rows are gathered in
# batches of 8 edges (one aligned 8-sublane store per batch per buffer) with
# the loop unrolled; the per-head reduction over d_k happens for all heads at
# once via one MXU matmul against `seg` (1/sqrt(d_k) folded in).
# ---------------------------------------------------------------------------
def _edge_prods_kernel(src_ref, dst_ref, q_ref, k_ref, seg_ref, prods_ref,
                       src_s, dst_s, *, tile_e, batch):
    base = pl.program_id(0) * tile_e

    def gather(i, carry):
        off = pl.multiple_of(i * batch, batch)
        q_rows = [q_ref[pl.ds(src_ref[base + off + j], 1), :]
                  for j in range(batch)]
        k_rows = [k_ref[pl.ds(dst_ref[base + off + j], 1), :]
                  for j in range(batch)]
        src_s[pl.ds(off, batch), :] = jnp.concatenate(q_rows, axis=0)
        dst_s[pl.ds(off, batch), :] = jnp.concatenate(k_rows, axis=0)
        return carry

    lax.fori_loop(0, tile_e // batch, gather, 0, unroll=2)

    prods_ref[...] = jnp.dot(src_s[...] * dst_s[...], seg_ref[...],
                             preferred_element_type=jnp.float32)


# ---------------------------------------------------------------------------
# Kernel C1: ONLINE segment max + sum-of-exp (torch_geometric.softmax stats).
# Single per-edge pass; nmax/nsum are resident accumulator OUTPUTS (constant
# block index across the edge-tile grid), initialized at t == 0.
# ---------------------------------------------------------------------------
def _segment_stats_kernel(grp_ref, prods_ref, nmax_ref, nsum_ref, *, tile_e):
    t = pl.program_id(0)
    base = t * tile_e

    @pl.when(t == 0)
    def _():
        nmax_ref[...] = jnp.full_like(nmax_ref, -jnp.inf)
        nsum_ref[...] = jnp.zeros_like(nsum_ref)

    def body(e, carry):
        g = grp_ref[base + e]
        p = prods_ref[pl.ds(e, 1), :]                      # [1, heads]
        m_old = nmax_ref[pl.ds(g, 1), :]
        m_new = jnp.maximum(m_old, p)
        # Flash-style rescaled running sum.  exp(-inf - finite) == 0 makes the
        # first touch of a group reduce to exp(p - p_max).
        nsum_ref[pl.ds(g, 1), :] = (nsum_ref[pl.ds(g, 1), :]
                                    * jnp.exp(m_old - m_new)
                                    + jnp.exp(p - m_new))
        nmax_ref[pl.ds(g, 1), :] = m_new
        return carry

    # RMW chain on nmax/nsum must stay in edge order (groups may repeat);
    # unrolling still lets index/prods loads overlap the previous update.
    lax.fori_loop(0, tile_e, body, 0, unroll=8)


# ---------------------------------------------------------------------------
# Kernel C2: normalize.  Edge-tiled ("parallel", megacore-eligible); per-edge
# stat gather batched 8 edges per iteration, then dense exp / divide.
# ---------------------------------------------------------------------------
def _normalize_kernel(grp_ref, prods_ref, nmax_ref, nsum_ref, att_ref,
                      gmax_s, gsum_s, *, tile_e, batch):
    base = pl.program_id(0) * tile_e

    def gather(i, carry):
        off = pl.multiple_of(i * batch, batch)
        m_rows = []
        s_rows = []
        for j in range(batch):
            g = grp_ref[base + off + j]
            m_rows.append(nmax_ref[pl.ds(g, 1), :])
            s_rows.append(nsum_ref[pl.ds(g, 1), :])
        gmax_s[pl.ds(off, batch), :] = jnp.concatenate(m_rows, axis=0)
        gsum_s[pl.ds(off, batch), :] = jnp.concatenate(s_rows, axis=0)
        return carry

    lax.fori_loop(0, tile_e // batch, gather, 0, unroll=2)

    ex = jnp.exp(prods_ref[...] - gmax_s[...])
    att_ref[...] = ex / (gsum_s[...] + 1e-16)


# ---------------------------------------------------------------------------
# Wrapper: mirrors SpGraphTransAttentionLayer.forward.
# Returns (attention [E, h], (v [N, d_k, h], prods [E, h])).
# ---------------------------------------------------------------------------
def sp_graph_trans_attention(x, edge, wq, bq, wk, bk, wv, bv, *,
                             heads, d_k, attention_norm_idx, tile_e=None):
    N, F = x.shape
    A = heads * d_k
    E = edge.shape[1]
    batch = 8

    if tile_e is None:
        tile_e = min(2048, max(128, _round_up(max(E, 1), 128)))
    E_pad = _round_up(max(E, 1), tile_e)
    n_tiles = E_pad // tile_e

    # Row tiling for the projection; N_pad >= N + 1 guarantees a dummy node
    # row that absorbs the scatter traffic of padded edges.
    tile_n = min(512, _round_up(N + 1, 8))
    N_pad = _round_up(N + 1, tile_n)
    assert N_pad >= N + 1, "dummy node row for padded edges must exist"

    x_pad = jnp.zeros((N_pad, F), jnp.float32).at[:N].set(x.astype(jnp.float32))

    # Fused QKV weights [F, 3A] / bias [1, 3A] (no scaling folded in here).
    w_qkv = jnp.concatenate([wq, wk, wv], axis=1).astype(jnp.float32)
    b_qkv = jnp.concatenate([bq, bk, bv], axis=1).astype(jnp.float32)

    # Edge indices as three 1-D int32 arrays (scalar-prefetched into SMEM).
    src = jnp.zeros((E_pad,), jnp.int32).at[:E].set(edge[0].astype(jnp.int32))
    dst = jnp.zeros((E_pad,), jnp.int32).at[:E].set(edge[1].astype(jnp.int32))
    grp = jnp.full((E_pad,), N_pad - 1, jnp.int32).at[:E].set(
        edge[attention_norm_idx].astype(jnp.int32))

    # Block-diagonal per-head reducer with 1/sqrt(d_k) folded in:
    # seg[a, h] = 1/sqrt(d_k) iff feature a belongs to head h.
    seg = jnp.asarray(
        (np.arange(A)[:, None] // d_k == np.arange(heads)[None, :])
        .astype(np.float32) / np.sqrt(d_k))

    vmem_cap = _vmem_cap_bytes()

    # ---- Kernel A: fused QKV projection (row-tiled, parallel) --------------
    q_p, k_p, v_p = pl.pallas_call(
        functools.partial(_qkv_proj_kernel, a_dim=A),
        out_shape=(jax.ShapeDtypeStruct((N_pad, A), jnp.float32),) * 3,
        grid_spec=pltpu.PrefetchScalarGridSpec(
            num_scalar_prefetch=0,
            grid=(N_pad // tile_n,),
            in_specs=[pl.BlockSpec((tile_n, F), lambda i: (i, 0)),
                      pl.BlockSpec((F, 3 * A), lambda i: (0, 0)),
                      pl.BlockSpec((1, 3 * A), lambda i: (0, 0))],
            out_specs=[pl.BlockSpec((tile_n, A), lambda i: (i, 0)),
                       pl.BlockSpec((tile_n, A), lambda i: (i, 0)),
                       pl.BlockSpec((tile_n, A), lambda i: (i, 0))]),
        compiler_params=pltpu.CompilerParams(
            dimension_semantics=("parallel",),
            vmem_limit_bytes=vmem_cap),
        cost_estimate=pl.CostEstimate(
            flops=2 * N_pad * F * 3 * A,
            transcendentals=0,
            bytes_accessed=4 * (N_pad * F + F * 3 * A + 3 * A
                                + 3 * N_pad * A)),
    )(x_pad, w_qkv, b_qkv)

    # ---- Kernel B: per-edge products (edge-tiled, megacore-parallel) -------
    prods_pad = pl.pallas_call(
        functools.partial(_edge_prods_kernel, tile_e=tile_e, batch=batch),
        out_shape=jax.ShapeDtypeStruct((E_pad, heads), jnp.float32),
        grid_spec=pltpu.PrefetchScalarGridSpec(
            num_scalar_prefetch=2,
            grid=(n_tiles,),
            in_specs=[pl.BlockSpec((N_pad, A), lambda t, s, d: (0, 0)),
                      pl.BlockSpec((N_pad, A), lambda t, s, d: (0, 0)),
                      pl.BlockSpec((A, heads), lambda t, s, d: (0, 0))],
            out_specs=pl.BlockSpec((tile_e, heads), lambda t, s, d: (t, 0)),
            scratch_shapes=[pltpu.VMEM((tile_e, A), jnp.float32),
                            pltpu.VMEM((tile_e, A), jnp.float32)]),
        compiler_params=pltpu.CompilerParams(
            dimension_semantics=("parallel",),
            vmem_limit_bytes=vmem_cap),
        cost_estimate=pl.CostEstimate(
            flops=2 * E_pad * A * heads + E_pad * A,
            transcendentals=0,
            bytes_accessed=4 * (2 * N_pad * A + A * heads + E_pad * heads
                                + 2 * E_pad)),
    )(src, dst, q_p, k_p, seg)

    # ---- Kernel C1: online segment max + sum-of-exp (accumulator outputs) --
    nmax, nsum = pl.pallas_call(
        functools.partial(_segment_stats_kernel, tile_e=tile_e),
        out_shape=(jax.ShapeDtypeStruct((N_pad, heads), jnp.float32),
                   jax.ShapeDtypeStruct((N_pad, heads), jnp.float32)),
        grid_spec=pltpu.PrefetchScalarGridSpec(
            num_scalar_prefetch=1,
            grid=(n_tiles,),
            in_specs=[pl.BlockSpec((tile_e, heads), lambda t, g: (t, 0))],
            out_specs=[pl.BlockSpec((N_pad, heads), lambda t, g: (0, 0)),
                       pl.BlockSpec((N_pad, heads), lambda t, g: (0, 0))]),
        compiler_params=pltpu.CompilerParams(
            dimension_semantics=("arbitrary",),
            vmem_limit_bytes=vmem_cap),
        cost_estimate=pl.CostEstimate(
            flops=6 * E_pad * heads,
            transcendentals=2 * E_pad * heads,
            bytes_accessed=4 * (E_pad * heads + 2 * N_pad * heads + E_pad)),
    )(grp, prods_pad)

    # ---- Kernel C2: normalize (edge-tiled, parallel) ------------------------
    att_pad = pl.pallas_call(
        functools.partial(_normalize_kernel, tile_e=tile_e, batch=batch),
        out_shape=jax.ShapeDtypeStruct((E_pad, heads), jnp.float32),
        grid_spec=pltpu.PrefetchScalarGridSpec(
            num_scalar_prefetch=1,
            grid=(n_tiles,),
            in_specs=[pl.BlockSpec((tile_e, heads), lambda t, g: (t, 0)),
                      pl.BlockSpec((N_pad, heads), lambda t, g: (0, 0)),
                      pl.BlockSpec((N_pad, heads), lambda t, g: (0, 0))],
            out_specs=pl.BlockSpec((tile_e, heads), lambda t, g: (t, 0)),
            scratch_shapes=[pltpu.VMEM((tile_e, heads), jnp.float32),
                            pltpu.VMEM((tile_e, heads), jnp.float32)]),
        compiler_params=pltpu.CompilerParams(
            dimension_semantics=("parallel",),
            vmem_limit_bytes=vmem_cap),
        cost_estimate=pl.CostEstimate(
            flops=4 * E_pad * heads,
            transcendentals=E_pad * heads,
            bytes_accessed=4 * (2 * E_pad * heads + 2 * N_pad * heads + E_pad)),
    )(grp, prods_pad, nmax, nsum)

    # ---- Glue: strip padding, restore module output layout -----------------
    prods = prods_pad[:E]
    att = att_pad[:E]
    # v.view(N, h, d_k).transpose(1, 2) -> [N, d_k, h]
    v = v_p[:N].reshape(N, heads, d_k).transpose(0, 2, 1)
    # TODO(synk): reweight_attention * edge_weights rescaling not implemented
    # (opt['reweight_attention'] is False / edge_weights is None here).
    # TODO(synk): Wout and the Sigmoid activation are created by the module
    # but never used in forward, so they are intentionally omitted.
    return att, (v, prods)


# ---------------------------------------------------------------------------
# Pure-JAX reference matching the PyTorch forward (for the self-test).
# ---------------------------------------------------------------------------
def _reference(x, edge, wq, bq, wk, bk, wv, bv, *, heads, d_k,
               attention_norm_idx):
    N = x.shape[0]
    q = x @ wq + bq[0]
    k = x @ wk + bk[0]
    v = x @ wv + bv[0]
    qh = q.reshape(N, heads, d_k).transpose(0, 2, 1)
    kh = k.reshape(N, heads, d_k).transpose(0, 2, 1)
    vh = v.reshape(N, heads, d_k).transpose(0, 2, 1)
    src = qh[edge[0]]
    dst_k = kh[edge[1]]
    prods = (src * dst_k).sum(axis=1) / np.sqrt(d_k)                  # [E, h]
    idx = edge[attention_norm_idx]
    gmax = jax.ops.segment_max(prods, idx, num_segments=N)
    ex = jnp.exp(prods - gmax[idx])
    gsum = jax.ops.segment_sum(ex, idx, num_segments=N)
    att = ex / (gsum[idx] + 1e-16)
    return att, vh, prods


if __name__ == "__main__":
    in_features = 8
    out_features = 16
    opt = {"leaky_relu_slope": 0.2, "heads": 4, "attention_dim": 16,
           "reweight_attention": False, "attention_norm_idx": 0}
    heads = opt["heads"]
    attention_dim = opt["attention_dim"]
    d_k = attention_dim // heads

    N, E = 16, 24

    key = jax.random.PRNGKey(0)
    kx, ke, kbq, kbk, kbv = jax.random.split(key, 5)

    x = jax.random.normal(kx, (N, in_features), dtype=jnp.float32)
    edge = jax.random.randint(ke, (2, E), 0, N, dtype=jnp.int32)

    # nn.init.constant_(weight, 1e-5) + spectral_norm: the constant matrix is
    # rank-1 with spectral norm c*sqrt(in*out), so the normalized weight is a
    # constant c/sigma matrix.
    c = 1e-5
    sigma = c * np.sqrt(in_features * attention_dim)
    w_eff = np.full((in_features, attention_dim), c / sigma, dtype=np.float32)
    wq = jnp.asarray(w_eff)
    wk = jnp.asarray(w_eff)
    wv = jnp.asarray(w_eff)
    bound = 1.0 / np.sqrt(in_features)
    bq = jax.random.uniform(kbq, (1, attention_dim), jnp.float32, -bound, bound)
    bk = jax.random.uniform(kbk, (1, attention_dim), jnp.float32, -bound, bound)
    bv = jax.random.uniform(kbv, (1, attention_dim), jnp.float32, -bound, bound)

    att, (v, prods) = sp_graph_trans_attention(
        x, edge, wq, bq, wk, bk, wv, bv,
        heads=heads, d_k=d_k, attention_norm_idx=opt["attention_norm_idx"])
    jax.block_until_ready((att, v, prods))

    att_ref, v_ref, prods_ref = _reference(
        x, edge, wq, bq, wk, bk, wv, bv,
        heads=heads, d_k=d_k, attention_norm_idx=opt["attention_norm_idx"])

    assert att.shape == (E, heads)
    assert prods.shape == (E, heads)
    assert v.shape == (N, d_k, heads)
    np.testing.assert_allclose(np.asarray(prods), np.asarray(prods_ref),
                               rtol=1e-5, atol=1e-6)
    np.testing.assert_allclose(np.asarray(att), np.asarray(att_ref),
                               rtol=1e-5, atol=1e-6)
    np.testing.assert_allclose(np.asarray(v), np.asarray(v_ref),
                               rtol=1e-5, atol=1e-6)

    print("KERNEL_OK")
</pallas_src>

<mosaic_0001>
module attributes {stable_mosaic.version = 11 : i64} {
  func.func @_qkv_proj_kernel(%arg0: i32, %arg1: memref<24x8xf32, #tpu.memory_space<vmem>>, %arg2: memref<8x48xf32, #tpu.memory_space<vmem>>, %arg3: memref<1x48xf32, #tpu.memory_space<vmem>>, %arg4: memref<24x16xf32, #tpu.memory_space<vmem>>, %arg5: memref<24x16xf32, #tpu.memory_space<vmem>>, %arg6: memref<24x16xf32, #tpu.memory_space<vmem>>) attributes {dimension_semantics = [#tpu.dimension_semantics<parallel>], iteration_bounds = array<i64: 1>, scalar_prefetch = 0 : i64, scratch_operands = 0 : i64, tpu.core_type = #tpu.core_type<tc>, window_params = [{transform_indices = @transform_0, window_bounds = array<i64: 24, 8>}, {pipeline_mode = #tpu.pipeline_mode<synchronous>, transform_indices = @transform_1, window_bounds = array<i64: 8, 48>}, {pipeline_mode = #tpu.pipeline_mode<synchronous>, transform_indices = @transform_2, window_bounds = array<i64: 1, 48>}, {transform_indices = @transform_3, window_bounds = array<i64: 24, 16>}, {transform_indices = @transform_4, window_bounds = array<i64: 24, 16>}, {transform_indices = @transform_5, window_bounds = array<i64: 24, 16>}]} {
    %c0 = arith.constant 0 : index
    %c0_0 = arith.constant 0 : index
    %0 = vector.load %arg1[%c0, %c0_0] : memref<24x8xf32, #tpu.memory_space<vmem>>, vector<24x8xf32>
    %c0_1 = arith.constant 0 : index
    %c0_2 = arith.constant 0 : index
    %1 = vector.load %arg2[%c0_1, %c0_2] : memref<8x48xf32, #tpu.memory_space<vmem>>, vector<8x48xf32>
    %cst = arith.constant dense<0.000000e+00> : vector<24x48xf32>
    %2 = tpu.matmul %0, %1, %cst {dimension_numbers = #tpu.dot_dimension_numbers<[1], [0], [0], [1], [0, 0, 1, 1], [], []>} : vector<24x8xf32>, vector<8x48xf32>, vector<24x48xf32> -> vector<24x48xf32>
    %c0_3 = arith.constant 0 : index
    %c0_4 = arith.constant 0 : index
    %3 = vector.load %arg3[%c0_3, %c0_4] : memref<1x48xf32, #tpu.memory_space<vmem>>, vector<1x48xf32>
    %4 = vector.broadcast %3 : vector<1x48xf32> to vector<24x48xf32>
    %5 = arith.addf %2, %4 : vector<24x48xf32>
    %6 = vector.extract_strided_slice %5 {offsets = [0, 0], sizes = [24, 16], strides = [1, 1]} : vector<24x48xf32> to vector<24x16xf32>
    %c0_5 = arith.constant 0 : index
    %c0_6 = arith.constant 0 : index
    %7 = vector.load %arg4[%c0_5, %c0_6] : memref<24x16xf32, #tpu.memory_space<vmem>>, vector<24x16xf32>
    tpu.vector_store %arg4[%c0_5, %c0_6], %6 {strides = array<i32>} : memref<24x16xf32, #tpu.memory_space<vmem>>, vector<24x16xf32>,
    %8 = vector.extract_strided_slice %5 {offsets = [0, 16], sizes = [24, 16], strides = [1, 1]} : vector<24x48xf32> to vector<24x16xf32>
    %c0_7 = arith.constant 0 : index
    %c0_8 = arith.constant 0 : index
    %9 = vector.load %arg5[%c0_7, %c0_8] : memref<24x16xf32, #tpu.memory_space<vmem>>, vector<24x16xf32>
    tpu.vector_store %arg5[%c0_7, %c0_8], %8 {strides = array<i32>} : memref<24x16xf32, #tpu.memory_space<vmem>>, vector<24x16xf32>,
    %10 = vector.extract_strided_slice %5 {offsets = [0, 32], sizes = [24, 16], strides = [1, 1]} : vector<24x48xf32> to vector<24x16xf32>
    %c0_9 = arith.constant 0 : index
    %c0_10 = arith.constant 0 : index
    %11 = vector.load %arg6[%c0_9, %c0_10] : memref<24x16xf32, #tpu.memory_space<vmem>>, vector<24x16xf32>
    tpu.vector_store %arg6[%c0_9, %c0_10], %10 {strides = array<i32>} : memref<24x16xf32, #tpu.memory_space<vmem>>, vector<24x16xf32>,
    return
  }
  func.func @transform_0(%arg0: i32) -> (i32, i32) {
    %c0_i32 = arith.constant 0 : i32
    %c0_i32_0 = arith.constant 0 : i32
    return %arg0, %c0_i32 : i32, i32
  }
  func.func @transform_1(%arg0: i32) -> (i32, i32) {
    %c0_i32 = arith.constant 0 : i32
    %c0_i32_0 = arith.constant 0 : i32
    %c0_i32_1 = arith.constant 0 : i32
    return %c0_i32, %c0_i32_0 : i32, i32
  }
  func.func @transform_2(%arg0: i32) -> (i32, i32) {
    %c0_i32 = arith.constant 0 : i32
    %c0_i32_0 = arith.constant 0 : i32
    %c0_i32_1 = arith.constant 0 : i32
    return %c0_i32, %c0_i32_0 : i32, i32
  }
  func.func @transform_3(%arg0: i32) -> (i32, i32) {
    %c0_i32 = arith.constant 0 : i32
    %c0_i32_0 = arith.constant 0 : i32
    return %arg0, %c0_i32 : i32, i32
  }
  func.func @transform_4(%arg0: i32) -> (i32, i32) {
    %c0_i32 = arith.constant 0 : i32
    %c0_i32_0 = arith.constant 0 : i32
    return %arg0, %c0_i32 : i32, i32
  }
  func.func @transform_5(%arg0: i32) -> (i32, i32) {
    %c0_i32 = arith.constant 0 : i32
    %c0_i32_0 = arith.constant 0 : i32
    return %arg0, %c0_i32 : i32, i32
  }
}

</mosaic_0001>

<llo_original>
// kernel: tpu_custom_call.1
$region0: #{tpu_custom_call.1}
  #allocation0 [shape = 'u32[]', space=smem, size = 0x4, offset = 0x4, fixed_abs, tag = 'smem constant byte address 0x4 - core index']
  #allocation1 [shape = 'u32[72,128]{1,0:T(1,128)}', space=vmem, size = 0x9000, scoped, tag = 'internal scratch']
  %s0 = inlined_call_operand.vmem [shape: f32[24,8], index: 0, kind: input, shape index: {}]
  %s1 = inlined_call_operand.vmem [shape: f32[8,48], index: 1, kind: input, shape index: {}]
  %s2 = inlined_call_operand.vmem [shape: f32[1,48], index: 2, kind: input, shape index: {}]
  %s3 = inlined_call_operand.vmem [shape: f32[24,16], index: 3, kind: output, shape index: {0}]
  %s4 = inlined_call_operand.vmem [shape: f32[24,16], index: 4, kind: output, shape index: {1}]
  %s5 = inlined_call_operand.vmem [shape: f32[24,16], index: 5, kind: output, shape index: {2}]
  %6 = xla_tuple %s3, %s4, %s5
  %s7 = sld [smem:[#allocation0]]
  $region38: #{tpu_custom_call.1} parent=0
    _
  %s9 = ssub.s32 1, %s7
  %s10 = scalar_select 0, %s9, %s7
  // Predicated region
  $region2: #{tpu_custom_call.1} parent=0 // pred_check
    _
  $region3: #{tpu_custom_call.1} parent=0 // pred_check_branch
    %12 = sbr.rel (0) target = $region5
  $region4: #{tpu_custom_call.1} parent=0 // pred_region
    _
  $region5: #{tpu_custom_call.1} parent=0 // pred_fallthru
    _
  // Predicated region
  $region6: #{tpu_custom_call.1} parent=0 // pred_check
    _
  $region7: #{tpu_custom_call.1} parent=0 // pred_check_branch
    %14 = sbr.rel (0) target = $region9
  $region8: #{tpu_custom_call.1} parent=0 // pred_region
    _
  $region9: #{tpu_custom_call.1} parent=0 // pred_fallthru
    _
  // Predicated region
  $region10: #{tpu_custom_call.1} parent=0 // pred_check
    _
  $region11: #{tpu_custom_call.1} parent=0 // pred_check_branch
    %16 = sbr.rel (0) target = $region13
  $region12: #{tpu_custom_call.1} parent=0 // pred_region
    _
  $region13: #{tpu_custom_call.1} parent=0 // pred_fallthru
    _
  %v17 = vld [vmem:[%s0] sm:$0xff]
  %v18 = vld [vmem:[%s0 + $0x8] sm:$0xff]
  %v19 = vld [vmem:[%s0 + $0x10] sm:$0xff]
  %v20 = vld [vmem:[%s1] sm:$0xff]
  %v21 = vld [vmem:[%s2] sm:$0x1]
  %v23 = vperm.slane %v21, 0
  %vm25 = vcmask 64512
  %v27 = vsel %vm25, %v17, 0
  %v30 = vsel %vm25, %v18, 0
  %v33 = vsel %vm25, %v19, 0
  %35 = vmatpush.msra.mxu0 0.0
  %36 = vmatpush.msra.mxu0 0.0
  %37 = vmatpush.msra.mxu0 0.0
  %38 = vmatpush.msra.mxu0 0.0
  %39 = vmatpush.msra.mxu0 0.0
  %40 = vmatpush.msra.mxu0 0.0
  %41 = vmatpush.msra.mxu0 0.0
  %42 = vmatpush.msra.mxu0 0.0
  %43 = vmatpush.msra.mxu0 0.0
  %44 = vmatpush.msra.mxu0 0.0
  %45 = vmatpush.msra.mxu0 0.0
  %46 = vmatpush.msra.mxu0 0.0
  %47 = vmatpush.msra.mxu0 0.0
  %48 = vmatpush.msra.mxu0 0.0
  %49 = vmatpush.msra.mxu0 0.0
  %50 = vmatpush.msra.mxu0 %v20
  %51 = vmatmul.f32.gmra.mxu0 %v27
  %v52 = vpop.f32.mrf.mxu0
  %v53 = vadd.f32 %v23, %v52
  %54 = vmatmul.f32.gmra.mxu0 %v30
  %v55 = vpop.f32.mrf.mxu0
  %v56 = vadd.f32 %v23, %v55
  %57 = vmatmul.f32.gmra.mxu0 %v33
  %v58 = vpop.f32.mrf.mxu0
  %v59 = vadd.f32 %v23, %v58
  %60 = vdwg.mxu0
  %vm61 = vcmask 130048
  %62 = vst.msk [vmem:[%s3] sm:$0xff] %vm61, %v53
  %63 = vst.msk [vmem:[%s3 + $0x8] sm:$0xff] %vm61, %v56
  %64 = vst.msk [vmem:[%s3 + $0x10] sm:$0xff] %vm61, %v59
  %68 = vrot.lane.b32.xlu0 %v53, 112
  %v69 = vpop.permute.xlu0 %68
  %70 = vrot.lane.b32.xlu0 %v56, 112
  %v71 = vpop.permute.xlu0 %70
  %72 = vrot.lane.b32.xlu0 %v59, 112
  %v73 = vpop.permute.xlu0 %72
  %77 = vst.msk [vmem:[%s4] sm:$0xff] %vm61, %v69
  %78 = vst.msk [vmem:[%s4 + $0x8] sm:$0xff] %vm61, %v71
  %79 = vst.msk [vmem:[%s4 + $0x10] sm:$0xff] %vm61, %v73
  %80 = vrot.lane.b32.xlu0 %v53, 96
  %v81 = vpop.permute.xlu0 %80
  %82 = vrot.lane.b32.xlu0 %v56, 96
  %v83 = vpop.permute.xlu0 %82
  %84 = vrot.lane.b32.xlu0 %v59, 96
  %v85 = vpop.permute.xlu0 %84
  %89 = vst.msk [vmem:[%s5] sm:$0xff] %vm61, %v81
  %90 = vst.msk [vmem:[%s5 + $0x8] sm:$0xff] %vm61, %v83
  %91 = vst.msk [vmem:[%s5 + $0x10] sm:$0xff] %vm61, %v85
  // Predicated region
  $region14: #{tpu_custom_call.1} parent=0 // pred_check
    _
  $region15: #{tpu_custom_call.1} parent=0 // pred_check_branch
    %93 = sbr.rel (0) target = $region17
  $region16: #{tpu_custom_call.1} parent=0 // pred_region
    _
  $region17: #{tpu_custom_call.1} parent=0 // pred_fallthru
    _
  // Predicated region
  $region18: #{tpu_custom_call.1} parent=0 // pred_check
    _
  $region19: #{tpu_custom_call.1} parent=0 // pred_check_branch
    %95 = sbr.rel (0) target = $region21
  $region20: #{tpu_custom_call.1} parent=0 // pred_region
    _
  $region21: #{tpu_custom_call.1} parent=0 // pred_fallthru
    _
  // Predicated region
  $region22: #{tpu_custom_call.1} parent=0 // pred_check
    _
  $region23: #{tpu_custom_call.1} parent=0 // pred_check_branch
    %97 = sbr.rel (0) target = $region25
  $region24: #{tpu_custom_call.1} parent=0 // pred_region
    _
  $region25: #{tpu_custom_call.1} parent=0 // pred_fallthru
    _
  // Predicated region
  $region26: #{tpu_custom_call.1} parent=0 // pred_check
    _
  $region27: #{tpu_custom_call.1} parent=0 // pred_check_branch
    %99 = sbr.rel (0) target = $region29
  $region28: #{tpu_custom_call.1} parent=0 // pred_region
    _
  $region29: #{tpu_custom_call.1} parent=0 // pred_fallthru
    _
  // Predicated region
  $region30: #{tpu_custom_call.1} parent=0 // pred_check
    _
  $region31: #{tpu_custom_call.1} parent=0 // pred_check_branch
    %101 = sbr.rel (0) target = $region33
  $region32: #{tpu_custom_call.1} parent=0 // pred_region
    _
  $region33: #{tpu_custom_call.1} parent=0 // pred_fallthru
    _
  // Predicated region
  $region34: #{tpu_custom_call.1} parent=0 // pred_check
    _
  $region35: #{tpu_custom_call.1} parent=0 // pred_check_branch
    %103 = sbr.rel (0) target = $region37
  $region36: #{tpu_custom_call.1} parent=0 // pred_region
    _
  $region37: #{tpu_custom_call.1} parent=0 // pred_fallthru
    _

</llo_original>
